<compile_context>
chip_gen: v7x
topology: tpu7x:2x2x1
jax: 0.10.0
libtpu: 0.0.40
codegen_flags: <defaults>
</compile_context>

<pallas_src>
import functools

import jax
import jax.numpy as jnp
from jax.experimental import pallas as pl
from jax.experimental.pallas import tpu as pltpu


def _cdiv(a, b):
    return -(-a // b)


def _round_up(x, m):
    return _cdiv(x, m) * m


def _sublane_unit(dtype):
    # native sublane tile: 8 for 32-bit, 16 for 16-bit, 32 for 8-bit dtypes
    return max(8, 32 // jnp.dtype(dtype).itemsize)


def _default_num_cores():
    # v7x has 2 TensorCores per chip (each with its own HBM path); v5e/v6e: 1.
    try:
        kind = jax.devices()[0].device_kind.lower()
    except Exception:
        return 1
    return 2 if ("v7" in kind or "7x" in kind) else 1


def _loss_kernel(logits_ref, labels_ref, p0_ref, ori_ref,
                 stats_ref, ypred_ref, acc_ref, ce_ref, *,
                 tiles_per_core, tile_r, rows, needs_mask, reduce_acc):
    core = pl.program_id(0)
    step = pl.program_id(1)

    # ---- per-core init (first inner step) -----------------------------------
    @pl.when(step == 0)
    def _init():
        acc_ref[...] = jnp.zeros_like(acc_ref)
        ce_ref[0] = jnp.float32(0.0)

    # ---- cross-entropy + argmax: once, on core 0, at step 0 so the EUP/XLU
    #      work hides under the prefetch of tiles 1..k ------------------------
    @pl.when(jnp.logical_and(core == 0, step == 0))
    def _ce():
        logits = logits_ref[...].astype(jnp.float32)          # (N, C)
        labels = labels_ref[...]                              # (N, 1) int32
        n, c = logits.shape
        col = jax.lax.broadcasted_iota(jnp.int32, (n, c), 1)

        m = jnp.max(logits, axis=1, keepdims=True)            # (N, 1)
        lse = m + jnp.log(jnp.sum(jnp.exp(logits - m), axis=1, keepdims=True))
        onehot = (col == labels).astype(jnp.float32)
        label_logit = jnp.sum(logits * onehot, axis=1, keepdims=True)
        ce_ref[0] = jnp.sum(lse - label_logit) / jnp.float32(n)

        # argmax over classes (first index of the max, like jnp.argmax)
        is_max = logits == m
        idx = jnp.min(jnp.where(is_max, col, jnp.int32(c)), axis=1,
                      keepdims=True)
        ypred_ref[0:n, :] = idx.astype(jnp.int32)

    # ---- steady state: streaming masked squared diff (pure VPU) -------------
    diff = p0_ref[...].astype(jnp.float32) - ori_ref[...].astype(jnp.float32)
    sq = diff * diff
    if needs_mask:
        blk = core * tiles_per_core + step                     # unclamped
        row_ids = blk * tile_r + jax.lax.broadcasted_iota(
            jnp.int32, (tile_r, 1), 0)
        sq = jnp.where(row_ids < rows, sq, 0.0)
    if reduce_acc:
        lane = sq.shape[1]
        acc_ref[...] += jnp.sum(sq.reshape(tile_r // 8, 8, lane), axis=0)
    else:
        acc_ref[...] += sq

    # ---- finalize: this core's partial sum (+ CE) into its stats block ------
    @pl.when(step == tiles_per_core - 1)
    def _fin():
        psum = jnp.sum(acc_ref[...])
        ce = ce_ref[0]
        ri = jax.lax.broadcasted_iota(jnp.int32, (8, 128), 0)
        ci = jax.lax.broadcasted_iota(jnp.int32, (8, 128), 1)
        stats_ref[...] = jnp.where(
            jnp.logical_and(ri == 0, ci == 0), psum,
            jnp.where(jnp.logical_and(ri == 1, ci == 0), ce, 0.0))


def loss_ce_and_mse(pred, label, ori, alpha=0.1, *,
                    target_tile_bytes=2 * 1024 * 1024, num_cores=None):
    """JAX/Pallas equivalent of loss_CE_and_MSE.forward.

    pred: tuple (reconstruction NCHW, logits (N, num_classes))
    label: (N,) integer class labels
    ori:   NCHW target for the reconstruction
    Returns (loss, Y_pred, loss1, loss2).
    """
    pred0, logits = pred
    n, n_classes = logits.shape
    total = int(pred0.size)

    # Lane width: largest multiple of 128 dividing the element count, so the
    # flat -> (rows, lane) reshape is copy-free (no HBM pad pass).
    lane = None
    for cand in (2048, 1024, 512, 256, 128):
        if total % cand == 0:
            lane = cand
            break

    p0_flat = pred0.reshape(-1)
    ori_flat = ori.reshape(-1)
    if lane is None:
        # Fallback only when no 128-divisor exists: zero-pad the tail to one
        # 128-lane row (padded zeros contribute 0 to the squared diff).
        lane = 128
        pad = _round_up(total, lane) - total
        p0_flat = jnp.pad(p0_flat, (0, pad))
        ori_flat = jnp.pad(ori_flat, (0, pad))
    rows = int(p0_flat.size) // lane

    itemsize = max(jnp.dtype(pred0.dtype).itemsize,
                   jnp.dtype(ori.dtype).itemsize)
    unit = max(_sublane_unit(pred0.dtype), _sublane_unit(ori.dtype))

    # Balanced row tiling: ~target_tile_bytes per input buffer; the remainder
    # is handled by in-kernel masking of the boundary tile (no row padding).
    max_rows = max(int(target_tile_bytes) // (lane * itemsize), unit)
    if rows <= max_rows:
        tile_r = rows
    else:
        n_splits = _cdiv(rows, max_rows)
        tile_r = _round_up(_cdiv(rows, n_splits), unit)
        if tile_r > rows:
            tile_r = rows
    num_tiles = _cdiv(rows, tile_r)

    if num_cores is None:
        num_cores = _default_num_cores()
    n_cores = max(1, min(int(num_cores), num_tiles))
    tpc = _cdiv(num_tiles, n_cores)
    needs_mask = (n_cores * tpc * tile_r) != rows

    reduce_acc = (tile_r % 8 == 0) and (tile_r > 8)
    acc_rows = 8 if (tile_r % 8 == 0) else tile_r

    p0_2d = p0_flat.reshape(rows, lane)
    ori_2d = ori_flat.reshape(rows, lane)
    labels_2d = label.astype(jnp.int32).reshape(n, 1)
    n_pad = _round_up(n, 8)

    def recon_map(c, i):
        # Clamp so a trailing empty tile (odd num_tiles with 2 cores) never
        # produces an out-of-range block; its rows are masked to 0 anyway.
        return (jnp.minimum(c * tpc + i, num_tiles - 1), 0)

    kernel = functools.partial(
        _loss_kernel, tiles_per_core=tpc, tile_r=tile_r, rows=rows,
        needs_mask=needs_mask, reduce_acc=reduce_acc)

    cost = pl.CostEstimate(
        flops=3 * total + 6 * n * n_classes,
        transcendentals=n * (n_classes + 1),
        bytes_accessed=int(total * (jnp.dtype(pred0.dtype).itemsize
                                    + jnp.dtype(ori.dtype).itemsize)
                           + logits.size * jnp.dtype(logits.dtype).itemsize
                           + n * 4
                           + n_cores * (8 * 128 * 4 + n_pad * 4)))

    grid_spec = pltpu.PrefetchScalarGridSpec(
        num_scalar_prefetch=0,
        grid=(n_cores, tpc),
        in_specs=[
            pl.BlockSpec((n, n_classes), lambda c, i: (0, 0)),   # logits
            pl.BlockSpec((n, 1), lambda c, i: (0, 0)),           # labels
            pl.BlockSpec((tile_r, lane), recon_map),              # pred0 tile
            pl.BlockSpec((tile_r, lane), recon_map),              # ori tile
        ],
        out_specs=(
            pl.BlockSpec((8, 128), lambda c, i: (c, 0)),          # per-core stats
            pl.BlockSpec((n_pad, 1), lambda c, i: (c, 0)),        # per-core argmax
        ),
        scratch_shapes=[
            pltpu.VMEM((acc_rows, lane), jnp.float32),            # sq-diff acc
            pltpu.SMEM((1,), jnp.float32),                        # CE stash
        ],
    )

    stats, ypred = pl.pallas_call(
        kernel,
        grid_spec=grid_spec,
        out_shape=(
            jax.ShapeDtypeStruct((n_cores * 8, 128), jnp.float32),
            jax.ShapeDtypeStruct((n_cores * n_pad, 1), jnp.int32),
        ),
        compiler_params=pltpu.CompilerParams(
            dimension_semantics=("parallel", "arbitrary"),
            vmem_limit_bytes=32 * 1024 * 1024),
        cost_estimate=cost,
    )(logits, labels_2d, p0_2d, ori_2d)

    # Trivial epilogue: combine per-core MSE partials + alpha-weighting.
    stats = stats.reshape(n_cores, 8, 128)
    mse = jnp.sum(stats[:, 0, 0]) / jnp.float32(total)
    ce = stats[0, 1, 0]
    y_pred = ypred.reshape(n_cores, n_pad)[0, :n]
    loss = jnp.float32(alpha) * ce + jnp.float32(1.0 - alpha) * mse
    return loss, y_pred, ce, mse


def _reference(pred, label, ori, alpha=0.1):
    pred0, logits = pred
    logits = logits.astype(jnp.float32)
    logz = jax.nn.logsumexp(logits, axis=1)
    lab_logit = jnp.take_along_axis(logits, label[:, None].astype(jnp.int32),
                                    axis=1)[:, 0]
    ce = jnp.mean(logz - lab_logit)
    mse = jnp.mean((pred0.astype(jnp.float32) - ori.astype(jnp.float32)) ** 2)
    loss = alpha * ce + (1.0 - alpha) * mse
    return loss, jnp.argmax(logits, axis=1), ce, mse


def _check(out, ref, atol, name):
    loss, yp, l1, l2 = out
    r_loss, r_yp, r_l1, r_l2 = ref
    assert jnp.allclose(loss, r_loss, atol=atol, rtol=atol), (name, loss, r_loss)
    assert jnp.allclose(l1, r_l1, atol=atol, rtol=atol), (name, l1, r_l1)
    assert jnp.allclose(l2, r_l2, atol=atol, rtol=atol), (name, l2, r_l2)
    assert jnp.array_equal(yp, r_yp.astype(jnp.int32)), (name, yp, r_yp)


if __name__ == "__main__":
    key = jax.random.PRNGKey(0)

    # ---- Test 1: small f32 inputs (single tile, no mask) --------------------
    k0, k1, k2, k3 = jax.random.split(key, 4)
    batch, ch, hw, num_classes = 2, 4, 16, 10
    pred_recon = jax.random.normal(k0, (batch, ch, hw, hw), dtype=jnp.float32)
    ori = jax.random.normal(k1, (batch, ch, hw, hw), dtype=jnp.float32)
    logits = jax.random.normal(k2, (batch, num_classes), dtype=jnp.float32)
    label = jax.random.randint(k3, (batch,), 0, num_classes, dtype=jnp.int32)
    pred = (pred_recon, logits)

    out1 = loss_ce_and_mse(pred, label, ori, alpha=0.1)
    jax.block_until_ready(out1)
    _check(out1, _reference(pred, label, ori, alpha=0.1), 1e-5, "t1")

    # ---- Test 2: bf16, multi-tile grid + boundary-tile masking --------------
    k4, k5, k6, k7 = jax.random.split(jax.random.PRNGKey(1), 4)
    b2, c2, h2, ncls2 = 4, 3, 48, 7
    pred_recon2 = jax.random.normal(k4, (b2, c2, h2, h2)).astype(jnp.bfloat16)
    ori2 = jax.random.normal(k5, (b2, c2, h2, h2)).astype(jnp.bfloat16)
    logits2 = jax.random.normal(k6, (b2, ncls2), dtype=jnp.float32)
    label2 = jax.random.randint(k7, (b2,), 0, ncls2, dtype=jnp.int32)
    pred2 = (pred_recon2, logits2)

    # small target tile forces num_tiles > 1 + the small-accumulator path
    out2 = loss_ce_and_mse(pred2, label2, ori2, alpha=0.3,
                           target_tile_bytes=32 * 1024)
    jax.block_until_ready(out2)
    ref2 = _reference(pred2, label2, ori2, alpha=0.3)
    _check(out2, ref2, 1e-4, "t2")

    # ---- Test 3: same, but force the 2-core (v7x-style) grid split ----------
    out3 = loss_ce_and_mse(pred2, label2, ori2, alpha=0.3,
                           target_tile_bytes=32 * 1024, num_cores=2)
    jax.block_until_ready(out3)
    _check(out3, ref2, 1e-4, "t3")

    # ---- Test 4: element count with no 128-divisor (tiny pad fallback) ------
    k8, k9, k10, k11 = jax.random.split(jax.random.PRNGKey(2), 4)
    pred_recon3 = jax.random.normal(k8, (2, 3, 5, 5), dtype=jnp.float32)
    ori3 = jax.random.normal(k9, (2, 3, 5, 5), dtype=jnp.float32)
    logits3 = jax.random.normal(k10, (2, 5), dtype=jnp.float32)
    label3 = jax.random.randint(k11, (2,), 0, 5, dtype=jnp.int32)
    pred3 = (pred_recon3, logits3)

    out4 = loss_ce_and_mse(pred3, label3, ori3, alpha=0.5)
    jax.block_until_ready(out4)
    _check(out4, _reference(pred3, label3, ori3, alpha=0.5), 1e-5, "t4")

    print("KERNEL_OK")
</pallas_src>

<mosaic_0001>
module attributes {stable_mosaic.version = 11 : i64} {
  func.func @_loss_kernel(%arg0: i32, %arg1: i32, %arg2: memref<2x10xf32, #tpu.memory_space<vmem>>, %arg3: memref<2x1xi32, #tpu.memory_space<vmem>>, %arg4: memref<1x2048xf32, #tpu.memory_space<vmem>>, %arg5: memref<1x2048xf32, #tpu.memory_space<vmem>>, %arg6: memref<8x128xf32, #tpu.memory_space<vmem>>, %arg7: memref<8x1xi32, #tpu.memory_space<vmem>>, %arg8: memref<1x2048xf32, #tpu.memory_space<vmem>>, %arg9: memref<1xf32, #tpu.memory_space<smem>>) attributes {dimension_semantics = [#tpu.dimension_semantics<parallel>, #tpu.dimension_semantics<arbitrary>], iteration_bounds = array<i64: 1, 1>, scalar_prefetch = 0 : i64, scratch_operands = 2 : i64, tpu.core_type = #tpu.core_type<tc>, window_params = [{pipeline_mode = #tpu.pipeline_mode<synchronous>, transform_indices = @transform_0, window_bounds = array<i64: 2, 10>}, {pipeline_mode = #tpu.pipeline_mode<synchronous>, transform_indices = @transform_1, window_bounds = array<i64: 2, 1>}, {transform_indices = @transform_2, window_bounds = array<i64: 1, 2048>}, {transform_indices = @transform_3, window_bounds = array<i64: 1, 2048>}, {transform_indices = @transform_4, window_bounds = array<i64: 8, 128>}, {transform_indices = @transform_5, window_bounds = array<i64: 8, 1>}]} {
    %c0_i32 = arith.constant 0 : i32
    %0 = arith.cmpi eq, %arg1, %c0_i32 : i32
    %1 = arith.extui %0 : i1 to i32
    %c0_i32_0 = arith.constant 0 : i32
    %2 = arith.cmpi ne, %1, %c0_i32_0 : i32
    scf.if %2 {
      %cst = arith.constant 0.000000e+00 : f32
      %18 = vector.broadcast %cst : f32 to vector<1x2048xf32>
      %c0_13 = arith.constant 0 : index
      %c0_14 = arith.constant 0 : index
      %19 = vector.load %arg8[%c0_13, %c0_14] : memref<1x2048xf32, #tpu.memory_space<vmem>>, vector<1x2048xf32>
      tpu.vector_store %arg8[%c0_13, %c0_14], %18 {strides = array<i32>} : memref<1x2048xf32, #tpu.memory_space<vmem>>, vector<1x2048xf32>,
      %cst_15 = arith.constant 0.000000e+00 : f32
      %c0_16 = arith.constant 0 : index
      %20 = memref.load %arg9[%c0_16] : memref<1xf32, #tpu.memory_space<smem>>
      memref.store %cst_15, %arg9[%c0_16] : memref<1xf32, #tpu.memory_space<smem>>
    } else {
    }
    %c0_i32_1 = arith.constant 0 : i32
    %3 = arith.cmpi eq, %arg0, %c0_i32_1 : i32
    %c0_i32_2 = arith.constant 0 : i32
    %4 = arith.cmpi eq, %arg1, %c0_i32_2 : i32
    %5 = arith.andi %3, %4 : i1
    %6 = arith.extui %5 : i1 to i32
    %c0_i32_3 = arith.constant 0 : i32
    %7 = arith.cmpi ne, %6, %c0_i32_3 : i32
    scf.if %7 {
      %c0_13 = arith.constant 0 : index
      %c0_14 = arith.constant 0 : index
      %18 = vector.load %arg2[%c0_13, %c0_14] : memref<2x10xf32, #tpu.memory_space<vmem>>, vector<2x10xf32>
      %c0_15 = arith.constant 0 : index
      %c0_16 = arith.constant 0 : index
      %19 = vector.load %arg3[%c0_15, %c0_16] : memref<2x1xi32, #tpu.memory_space<vmem>>, vector<2x1xi32>
      %20 = tpu.iota {dimensions = array<i32: 1>} : vector<2x10xi32>
      %cst = arith.constant dense<0xFF800000> : vector<2xf32>
      %21 = vector.multi_reduction <maximumf>, %18, %cst [1] : vector<2x10xf32> to vector<2xf32>
      %22 = vector.shape_cast %21 : vector<2xf32> to vector<2x1xf32>
      %23 = vector.broadcast %22 : vector<2x1xf32> to vector<2x10xf32>
      %24 = arith.subf %18, %23 : vector<2x10xf32>
      %25 = math.exp %24 : vector<2x10xf32>
      %cst_17 = arith.constant dense<0.000000e+00> : vector<2xf32>
      %26 = vector.multi_reduction <add>, %25, %cst_17 [1] : vector<2x10xf32> to vector<2xf32>
      %27 = vector.shape_cast %26 : vector<2xf32> to vector<2x1xf32>
      %28 = math.log %27 : vector<2x1xf32>
      %29 = arith.addf %22, %28 : vector<2x1xf32>
      %30 = vector.broadcast %19 : vector<2x1xi32> to vector<2x10xi32>
      %31 = arith.cmpi eq, %20, %30 : vector<2x10xi32>
      %32 = arith.extui %31 : vector<2x10xi1> to vector<2x10xi32>
      %33 = arith.sitofp %32 : vector<2x10xi32> to vector<2x10xf32>
      %34 = arith.mulf %18, %33 : vector<2x10xf32>
      %cst_18 = arith.constant dense<0.000000e+00> : vector<2xf32>
      %35 = vector.multi_reduction <add>, %34, %cst_18 [1] : vector<2x10xf32> to vector<2xf32>
      %36 = vector.shape_cast %35 : vector<2xf32> to vector<2x1xf32>
      %37 = arith.subf %29, %36 : vector<2x1xf32>
      %38 = vector.shape_cast %37 : vector<2x1xf32> to vector<1x2x1xf32>
      %cst_19 = arith.constant dense<0.000000e+00> : vector<1xf32>
      %39 = vector.multi_reduction <add>, %38, %cst_19 [1, 2] : vector<1x2x1xf32> to vector<1xf32>
      %40 = vector.shape_cast %39 : vector<1xf32> to vector<1x1x1xf32>
      %41 = vector.extract %40[0, 0, 0] : f32 from vector<1x1x1xf32>
      %cst_20 = arith.constant 2.000000e+00 : f32
      %42 = arith.divf %41, %cst_20 : f32
      %c0_21 = arith.constant 0 : index
      %43 = memref.load %arg9[%c0_21] : memref<1xf32, #tpu.memory_space<smem>>
      memref.store %42, %arg9[%c0_21] : memref<1xf32, #tpu.memory_space<smem>>
      %44 = vector.broadcast %22 : vector<2x1xf32> to vector<2x10xf32>
      %45 = arith.cmpf oeq, %18, %44 : vector<2x10xf32>
      %c10_i32 = arith.constant 10 : i32
      %46 = vector.broadcast %c10_i32 : i32 to vector<2x10xi32>
      %47 = arith.select %45, %20, %46 : vector<2x10xi1>, vector<2x10xi32>
      %cst_22 = arith.constant dense<2147483647> : vector<2xi32>
      %48 = vector.multi_reduction <minsi>, %47, %cst_22 [1] : vector<2x10xi32> to vector<2xi32>
      %49 = vector.shape_cast %48 : vector<2xi32> to vector<2x1xi32>
      %c0_23 = arith.constant 0 : index
      %c0_24 = arith.constant 0 : index
      %50 = vector.load %arg7[%c0_23, %c0_24] : memref<8x1xi32, #tpu.memory_space<vmem>>, vector<2x1xi32>
      tpu.vector_store %arg7[%c0_23, %c0_24], %49 {strides = array<i32>} : memref<8x1xi32, #tpu.memory_space<vmem>>, vector<2x1xi32>,
    } else {
    }
    %c0 = arith.constant 0 : index
    %c0_4 = arith.constant 0 : index
    %8 = vector.load %arg4[%c0, %c0_4] : memref<1x2048xf32, #tpu.memory_space<vmem>>, vector<1x2048xf32>
    %c0_5 = arith.constant 0 : index
    %c0_6 = arith.constant 0 : index
    %9 = vector.load %arg5[%c0_5, %c0_6] : memref<1x2048xf32, #tpu.memory_space<vmem>>, vector<1x2048xf32>
    %10 = arith.subf %8, %9 : vector<1x2048xf32>
    %11 = arith.mulf %10, %10 : vector<1x2048xf32>
    %c0_7 = arith.constant 0 : index
    %c0_8 = arith.constant 0 : index
    %12 = vector.load %arg8[%c0_7, %c0_8] : memref<1x2048xf32, #tpu.memory_space<vmem>>, vector<1x2048xf32>
    %13 = arith.addf %12, %11 : vector<1x2048xf32>
    %c0_9 = arith.constant 0 : index
    %c0_10 = arith.constant 0 : index
    %14 = vector.load %arg8[%c0_9, %c0_10] : memref<1x2048xf32, #tpu.memory_space<vmem>>, vector<1x2048xf32>
    tpu.vector_store %arg8[%c0_9, %c0_10], %13 {strides = array<i32>} : memref<1x2048xf32, #tpu.memory_space<vmem>>, vector<1x2048xf32>,
    %c0_i32_11 = arith.constant 0 : i32
    %15 = arith.cmpi eq, %arg1, %c0_i32_11 : i32
    %16 = arith.extui %15 : i1 to i32
    %c0_i32_12 = arith.constant 0 : i32
    %17 = arith.cmpi ne, %16, %c0_i32_12 : i32
    scf.if %17 {
      %c0_13 = arith.constant 0 : index
      %c0_14 = arith.constant 0 : index
      %18 = vector.load %arg8[%c0_13, %c0_14] : memref<1x2048xf32, #tpu.memory_space<vmem>>, vector<1x2048xf32>
      %19 = vector.shape_cast %18 : vector<1x2048xf32> to vector<1x1x2048xf32>
      %cst = arith.constant dense<0.000000e+00> : vector<1xf32>
      %20 = vector.multi_reduction <add>, %19, %cst [1, 2] : vector<1x1x2048xf32> to vector<1xf32>
      %21 = vector.shape_cast %20 : vector<1xf32> to vector<1x1x1xf32>
      %22 = vector.extract %21[0, 0, 0] : f32 from vector<1x1x1xf32>
      %c0_15 = arith.constant 0 : index
      %23 = memref.load %arg9[%c0_15] : memref<1xf32, #tpu.memory_space<smem>>
      %24 = tpu.iota {dimensions = array<i32: 0>} : vector<8x128xi32>
      %25 = tpu.iota {dimensions = array<i32: 1>} : vector<8x128xi32>
      %c0_i32_16 = arith.constant 0 : i32
      %26 = vector.broadcast %c0_i32_16 : i32 to vector<8x128xi32>
      %27 = arith.cmpi eq, %24, %26 : vector<8x128xi32>
      %c0_i32_17 = arith.constant 0 : i32
      %28 = vector.broadcast %c0_i32_17 : i32 to vector<8x128xi32>
      %29 = arith.cmpi eq, %25, %28 : vector<8x128xi32>
      %30 = arith.andi %27, %29 : vector<8x128xi1>
      %c1_i32 = arith.constant 1 : i32
      %31 = vector.broadcast %c1_i32 : i32 to vector<8x128xi32>
      %32 = arith.cmpi eq, %24, %31 : vector<8x128xi32>
      %c0_i32_18 = arith.constant 0 : i32
      %33 = vector.broadcast %c0_i32_18 : i32 to vector<8x128xi32>
      %34 = arith.cmpi eq, %25, %33 : vector<8x128xi32>
      %35 = arith.andi %32, %34 : vector<8x128xi1>
      %cst_19 = arith.constant 0.000000e+00 : f32
      %36 = vector.broadcast %23 : f32 to vector<8x128xf32>
      %37 = vector.broadcast %cst_19 : f32 to vector<8x128xf32>
      %38 = arith.select %35, %36, %37 : vector<8x128xi1>, vector<8x128xf32>
      %39 = vector.broadcast %22 : f32 to vector<8x128xf32>
      %40 = arith.select %30, %39, %38 : vector<8x128xi1>, vector<8x128xf32>
      %c0_20 = arith.constant 0 : index
      %c0_21 = arith.constant 0 : index
      %41 = vector.load %arg6[%c0_20, %c0_21] : memref<8x128xf32, #tpu.memory_space<vmem>>, vector<8x128xf32>
      tpu.vector_store %arg6[%c0_20, %c0_21], %40 {strides = array<i32>} : memref<8x128xf32, #tpu.memory_space<vmem>>, vector<8x128xf32>,
    } else {
    }
    return
  }
  func.func @transform_0(%arg0: i32, %arg1: i32) -> (i32, i32) {
    %c0_i32 = arith.constant 0 : i32
    %c0_i32_0 = arith.constant 0 : i32
    %c0_i32_1 = arith.constant 0 : i32
    return %c0_i32, %c0_i32_0 : i32, i32
  }
  func.func @transform_1(%arg0: i32, %arg1: i32) -> (i32, i32) {
    %c0_i32 = arith.constant 0 : i32
    %c0_i32_0 = arith.constant 0 : i32
    %c0_i32_1 = arith.constant 0 : i32
    return %c0_i32, %c0_i32_0 : i32, i32
  }
  func.func @transform_2(%arg0: i32, %arg1: i32) -> (i32, i32) {
    %c1_i32 = arith.constant 1 : i32
    %0 = arith.muli %arg0, %c1_i32 : i32
    %1 = arith.addi %0, %arg1 : i32
    %c0_i32 = arith.constant 0 : i32
    %2 = arith.minsi %1, %c0_i32 : i32
    %c0_i32_0 = arith.constant 0 : i32
    %c0_i32_1 = arith.constant 0 : i32
    return %2, %c0_i32_0 : i32, i32
  }
  func.func @transform_3(%arg0: i32, %arg1: i32) -> (i32, i32) {
    %c1_i32 = arith.constant 1 : i32
    %0 = arith.muli %arg0, %c1_i32 : i32
    %1 = arith.addi %0, %arg1 : i32
    %c0_i32 = arith.constant 0 : i32
    %2 = arith.minsi %1, %c0_i32 : i32
    %c0_i32_0 = arith.constant 0 : i32
    %c0_i32_1 = arith.constant 0 : i32
    return %2, %c0_i32_0 : i32, i32
  }
  func.func @transform_4(%arg0: i32, %arg1: i32) -> (i32, i32) {
    %c0_i32 = arith.constant 0 : i32
    %c0_i32_0 = arith.constant 0 : i32
    return %arg0, %c0_i32 : i32, i32
  }
  func.func @transform_5(%arg0: i32, %arg1: i32) -> (i32, i32) {
    %c0_i32 = arith.constant 0 : i32
    %c0_i32_0 = arith.constant 0 : i32
    return %arg0, %c0_i32 : i32, i32
  }
}

</mosaic_0001>

<llo_original>
// kernel: tpu_custom_call.1
$region0: #{tpu_custom_call.1}
  #allocation0 [shape = 'u32[]', space=smem, size = 0x4, offset = 0x4, fixed_abs, tag = 'smem constant byte address 0x4 - core index']
  #allocation1 [shape = 'u32[144,128]{1,0:T(1,128)}', space=vmem, size = 0x12000, scoped, tag = 'internal scratch']
  #allocation2 [shape = 'f32[1,2048]{1,0:T(1,128)}', space=vmem, size = 0x2000, scoped, tag = 'scratch operand']
  #allocation3 [shape = 'f32[1]{0:T(128)}', space=smem, size = 0x200, scoped, tag = 'scratch operand']
  %s0 = inlined_call_operand.vmem [shape: f32[2,10], index: 0, kind: input, shape index: {}]
  %s1 = inlined_call_operand.vmem [shape: s32[2,1], index: 1, kind: input, shape index: {}]
  %s2 = inlined_call_operand.hbm [shape: f32[1,2048], index: 2, kind: input, shape index: {}]
  %s3 = inlined_call_operand.hbm [shape: f32[1,2048], index: 3, kind: input, shape index: {}]
  %s4 = inlined_call_operand.hbm [shape: f32[8,128], index: 4, kind: output, shape index: {0}]
  %s5 = inlined_call_operand.vmem [shape: s32[8,1], index: 5, kind: output, shape index: {1}]
  %6 = xla_tuple %s4, %s5
  %s7 = sld [smem:[#allocation0]]
  $region54: #{tpu_custom_call.1} parent=0
    _
  %s9 = ssub.s32 1, %s7
  %s10 = scalar_select 0, %s9, %s7
  $region1: #{tpu_custom_call.1} parent=0
    #allocation4 [shape = 'u8[8192]{0}', space=vmem, size = 0x2000, scoped, tag = 'input window, operand 2, single buffered']
    #allocation5 [shape = 's32[1]{0}', space=sflag, size = 0x4, scoped, tag = 'scoped memory for tpu_custom_call.1']
    #allocation6 [shape = 's32[1]{0}', space=sflag, size = 0x4, scoped, tag = 'scoped memory for tpu_custom_call.1']
    #allocation7 [shape = 'u8[8192]{0}', space=vmem, size = 0x2000, scoped, tag = 'input window, operand 3, single buffered']
    #allocation8 [shape = 's32[1]{0}', space=sflag, size = 0x4, scoped, tag = 'scoped memory for tpu_custom_call.1']
    #allocation9 [shape = 'u8[4096]{0}', space=vmem, size = 0x1000, scoped, tag = 'output window, operand 0, single buffered']
    %11 = vsyncpa [#allocation5], 0
    %12 = vsyncpa [#allocation8], 0
    %13 = vsyncpa [#allocation6], 0
    // Predicated region
    $region2: #{tpu_custom_call.1} parent=1 // pred_check
      _
    $region3: #{tpu_custom_call.1} parent=1 // pred_check_branch
      %15 = sbr.rel (0) target = $region5
    $region4: #{tpu_custom_call.1} parent=1 // pred_region
      _
    $region5: #{tpu_custom_call.1} parent=1 // pred_fallthru
      _
    // Predicated region
    $region6: #{tpu_custom_call.1} parent=1 // pred_check
      _
    $region7: #{tpu_custom_call.1} parent=1 // pred_check_branch
      %17 = sbr.rel (0) target = $region9
    $region8: #{tpu_custom_call.1} parent=1 // pred_region
      _
    $region9: #{tpu_custom_call.1} parent=1 // pred_fallthru
      _
    // Predicated region
    $region10: #{tpu_custom_call.1} parent=1 // pred_check
      _
    $region11: #{tpu_custom_call.1} parent=1 // pred_check_branch
      %19 = sbr.rel (0) target = $region13
    $region12: #{tpu_custom_call.1} parent=1 // pred_region
      %s20 = sadd.s32 0, 0
      %p21 = scmp.lt.s32.totalorder %s20, 0
      %s22 = scalar_select %p21, %s20, 0
      %s24 = ssub.s32 256, 256
      %25 = vsyncadd [#allocation5], %s24
      %s26 = smul.addr %s22, 16
      %s27 = smul.addr %s26, 16
      %s28 = scalar_lea.hbm %s2, %s27
      %s30 = sshll.u32 [#allocation4], 4
      %s31 = int_to_ptr.vmem [resolvable:$true] %s30
      %33 = dma.hbm_to_vmem [thread:$0]  %s28, 256, %s31, [#allocation5]
    $region13: #{tpu_custom_call.1} parent=1 // pred_fallthru
      _
    // Predicated region
    $region14: #{tpu_custom_call.1} parent=1 // pred_check
      _
    $region15: #{tpu_custom_call.1} parent=1 // pred_check_branch
      %35 = sbr.rel (0) target = $region17
    $region16: #{tpu_custom_call.1} parent=1 // pred_region
      %s36 = sadd.s32 0, 0
      %p37 = scmp.lt.s32.totalorder %s36, 0
      %s38 = scalar_select %p37, %s36, 0
      %s40 = ssub.s32 256, 256
      %41 = vsyncadd [#allocation8], %s40
      %s42 = smul.addr %s38, 16
      %s43 = smul.addr %s42, 16
      %s44 = scalar_lea.hbm %s3, %s43
      %s46 = sshll.u32 [#allocation7], 4
      %s47 = int_to_ptr.vmem [resolvable:$true] %s46
      %49 = dma.hbm_to_vmem [thread:$0]  %s44, 256, %s47, [#allocation8]
    $region17: #{tpu_custom_call.1} parent=1 // pred_fallthru
      _
    // Predicated region
    $region18: #{tpu_custom_call.1} parent=1 // pred_check
      _
    $region19: #{tpu_custom_call.1} parent=1 // pred_check_branch
      %51 = sbr.rel (0) target = $region21
    $region20: #{tpu_custom_call.1} parent=1 // pred_region
      %52 = dma.done [#allocation5], 256
    $region21: #{tpu_custom_call.1} parent=1 // pred_fallthru
      _
    // Predicated region
    $region22: #{tpu_custom_call.1} parent=1 // pred_check
      _
    $region23: #{tpu_custom_call.1} parent=1 // pred_check_branch
      %54 = sbr.rel (0) target = $region25
    $region24: #{tpu_custom_call.1} parent=1 // pred_region
      %55 = dma.done [#allocation8], 256
    $region25: #{tpu_custom_call.1} parent=1 // pred_fallthru
      _
    %s56 = sadd.s32 0, 0
    %p57 = scmp.lt.s32.totalorder %s56, 0
    %s58 = scalar_select %p57, %s56, 0
    %s59 = sadd.s32 0, 0
    %p60 = scmp.lt.s32.totalorder %s59, 0
    %s61 = scalar_select %p60, %s59, 0
    %p62 = scmp.eq.s32.totalorder 0, 0
    // Predicated region
    $region26: #{tpu_custom_call.1} parent=1 // pred_check
      %p63 = pneg %p62
    $region27: #{tpu_custom_call.1} parent=1 // pred_check_branch
      %65 = sbr.rel (%p63) target = $region29
    $region28: #{tpu_custom_call.1} parent=1 // pred_region
      %66 = vst [vmem:[#allocation2] sm:$0xff] 0.0
      %67 = vst [vmem:[#allocation2 + $0x8] sm:$0xff] 0.0
      %s68 = scalar_lea.smem [#allocation3], 0
      %69 = sst [smem:[%s68]] 0.0
    $region29: #{tpu_custom_call.1} parent=1 // pred_fallthru
      _
    %p70 = scmp.eq.s32.totalorder 0, 0
    %p71 = pnand %p70, %p62
    %p72 = pneg %p71
    // Predicated region
    $region30: #{tpu_custom_call.1} parent=1 // pred_check
      _
    $region31: #{tpu_custom_call.1} parent=1 // pred_check_branch
      %74 = sbr.rel (%p71) target = $region33
    $region32: #{tpu_custom_call.1} parent=1 // pred_region
      %v75 = vld [vmem:[%s0] sm:$0x3]
      %v76 = vld [vmem:[%s1] sm:$0x3]
      %v77 = vlaneseq
      %v78 = vand.u32 %v77, 127
      %vm79 = vcmask 74752
      %v80 = vsel %vm79, %v75, -inf
      %81 = vmax.xlane.f32.xlu0 %v80
      %v82 = vpop.xlane.xlu0 %81
      %v83 = vsub.f32 %v75, %v82
      %v84 = vmul.f32 %v83, 1.442695
      %v85 = vpow.pop %v84
      %v86 = vsel %vm79, %v85, 0.0
      %87 = vadd.xlane.f32.xlu0 %v86
      %v88 = vpop.xlane.xlu0 %87
      %v89 = vlog2.pop %v88
      %v90 = vmul.f32 %v89, 0.6931472
      %v91 = vadd.f32 %v82, %v90
      %92 = vset.pattern.permute.xlu0 0
      %93 = vperm.xlu0 %92, %v76
      %v94 = vpop.permute.xlu0 %93
      %vm95 = vcmp.eq.s32.totalorder %v78, %v94
      %v96 = vsel %vm95, 1, 0
      %v97 = vcvt.s32.f32 %v96
      %v98 = vmul.f32 %v75, %v97
      %v99 = vsel %vm79, %v98, 0.0
      %100 = vadd.xlane.f32.xlu0 %v99
      %v101 = vpop.xlane.xlu0 %100
      %v102 = vsub.f32 %v91, %v101
      %vm103 = vcmask 1024
      %v104 = vsel %vm103, %v102, 0.0
      %105 = vadd.xlane.f32.xlu0 %v104
      %v106 = vpop.xlane.xlu0 %105
      %v107 = vrot.slane %v106, 4
      %v108 = vadd.f32 %v106, %v107
      %v109 = vrot.slane %v108, 2
      %v110 = vadd.f32 %v108, %v109
      %v111 = vrot.slane %v110, 1
      %v112 = vadd.f32 %v110, %v111
      %s113 = vtos %v112
      %v114 = vrcp.pop 2.0
      %s115 = vtos %v114
      %s116 = smul.f32 %s113, %s115
      %s117 = scalar_lea.smem [#allocation3], 0
      %118 = sst [smem:[%s117]] %s116
      %vm119 = vcmp.eq.f32.partialorder %v75, %v82
      %v120 = vsel %vm119, %v78, 10
      %v121 = vsel %vm79, %v120, 2147483647
      %v122 = vand.u32 %v121, 65535
      %v123 = vshra.s32 %v121, 16
      %v124 = vcvt.s32.f32 %v122
      %v125 = vcvt.s32.f32 %v123
      %126 = vmin.xlane.f32.xlu0 %v125
      %v127 = vpop.xlane.xlu0 %126
      %vm128 = vcmp.eq.f32.partialorder %v125, %v127
      %v129 = vsel %vm128, %v124, inf
      %130 = vmin.xlane.f32.xlu0 %v129
      %v131 = vpop.xlane.xlu0 %130
      %v132 = vcvt.f32.s32 %v131
      %v133 = vcvt.f32.s32 %v127
      %v134 = vshll.u32 %v133, 16
      %v135 = vadd.s32 %v134, %v132
      %136 = vst.msk [vmem:[%s5] sm:$0x3] %vm103, %v135
    $region33: #{tpu_custom_call.1} parent=1 // pred_fallthru
      _
    %v137 = vld [vmem:[#allocation4] sm:$0xff]
    %v138 = vld [vmem:[#allocation4 + $0x8] sm:$0xff]
    %v139 = vld [vmem:[#allocation7] sm:$0xff]
    %v140 = vld [vmem:[#allocation7 + $0x8] sm:$0xff]
    %v141 = vsub.f32 %v137, %v139
    %v142 = vsub.f32 %v138, %v140
    %v143 = vmul.f32 %v141, %v141
    %v144 = vmul.f32 %v142, %v142
    %v145 = vld [vmem:[#allocation2] sm:$0xff]
    %v146 = vld [vmem:[#allocation2 + $0x8] sm:$0xff]
    %v147 = vadd.f32 %v145, %v143
    %v148 = vadd.f32 %v146, %v144
    %149 = vst [vmem:[#allocation2] sm:$0xff] %v147
    %150 = vst [vmem:[#allocation2 + $0x8] sm:$0xff] %v148
    // Predicated region
    $region34: #{tpu_custom_call.1} parent=1 // pred_check
      %p151 = pneg %p62
    $region35: #{tpu_custom_call.1} parent=1 // pred_check_branch
      %153 = sbr.rel (%p151) target = $region37
    $region36: #{tpu_custom_call.1} parent=1 // pred_region
      %v154 = vld [vmem:[#allocation2] sm:$0xff]
      %v155 = vld [vmem:[#allocation2 + $0x8] sm:$0xff]
      %v158 = vlaneseq
      %v159 = vshrl.u32 %v158, 7
      %v160 = vsub.s32 0, %v159
      %v161 = vrot.slane %v154, %v160
      %v162 = vlaneseq
      %v163 = vshrl.u32 %v162, 7
      %v164 = vsub.s32 1, %v163
      %v165 = vrot.slane %v154, %v164
      %v166 = vlaneseq
      %v167 = vshrl.u32 %v166, 7
      %v168 = vsub.s32 2, %v167
      %v169 = vrot.slane %v154, %v168
      %v170 = vlaneseq
      %v171 = vshrl.u32 %v170, 7
      %v172 = vsub.s32 3, %v171
      %v173 = vrot.slane %v154, %v172
      %v174 = vlaneseq
      %v175 = vshrl.u32 %v174, 7
      %v176 = vsub.s32 4, %v175
      %v177 = vrot.slane %v154, %v176
      %v178 = vlaneseq
      %v179 = vshrl.u32 %v178, 7
      %v180 = vsub.s32 5, %v179
      %v181 = vrot.slane %v154, %v180
      %v182 = vlaneseq
      %v183 = vshrl.u32 %v182, 7
      %v184 = vsub.s32 6, %v183
      %v185 = vrot.slane %v154, %v184
      %v186 = vlaneseq
      %v187 = vshrl.u32 %v186, 7
      %v188 = vsub.s32 7, %v187
      %v189 = vrot.slane %v154, %v188
      %v190 = vlaneseq
      %v191 = vshrl.u32 %v190, 7
      %v192 = vsub.s32 0, %v191
      %v193 = vrot.slane %v155, %v192
      %v194 = vlaneseq
      %v195 = vshrl.u32 %v194, 7
      %v196 = vsub.s32 1, %v195
      %v197 = vrot.slane %v155, %v196
      %v198 = vlaneseq
      %v199 = vshrl.u32 %v198, 7
      %v200 = vsub.s32 2, %v199
      %v201 = vrot.slane %v155, %v200
      %v202 = vlaneseq
      %v203 = vshrl.u32 %v202, 7
      %v204 = vsub.s32 3, %v203
      %v205 = vrot.slane %v155, %v204
      %v206 = vlaneseq
      %v207 = vshrl.u32 %v206, 7
      %v208 = vsub.s32 4, %v207
      %v209 = vrot.slane %v155, %v208
      %v210 = vlaneseq
      %v211 = vshrl.u32 %v210, 7
      %v212 = vsub.s32 5, %v211
      %v213 = vrot.slane %v155, %v212
      %v214 = vlaneseq
      %v215 = vshrl.u32 %v214, 7
      %v216 = vsub.s32 6, %v215
      %v217 = vrot.slane %v155, %v216
      %v218 = vlaneseq
      %v219 = vshrl.u32 %v218, 7
      %v220 = vsub.s32 7, %v219
      %v221 = vrot.slane %v155, %v220
      %vm238 = vcmask 1040384
      %v239 = vsel %vm238, %v161, 0.0
      %v240 = vsel %vm238, %v165, 0.0
      %v241 = vadd.f32 %v239, %v240
      %v242 = vsel %vm238, %v169, 0.0
      %v243 = vadd.f32 %v241, %v242
      %v244 = vsel %vm238, %v173, 0.0
      %v245 = vadd.f32 %v243, %v244
      %v246 = vsel %vm238, %v177, 0.0
      %v247 = vadd.f32 %v245, %v246
      %v248 = vsel %vm238, %v181, 0.0
      %v249 = vadd.f32 %v247, %v248
      %v250 = vsel %vm238, %v185, 0.0
      %v251 = vadd.f32 %v249, %v250
      %v252 = vsel %vm238, %v189, 0.0
      %v253 = vadd.f32 %v251, %v252
      %v254 = vsel %vm238, %v193, 0.0
      %v255 = vadd.f32 %v253, %v254
      %v256 = vsel %vm238, %v197, 0.0
      %v257 = vadd.f32 %v255, %v256
      %v258 = vsel %vm238, %v201, 0.0
      %v259 = vadd.f32 %v257, %v258
      %v260 = vsel %vm238, %v205, 0.0
      %v261 = vadd.f32 %v259, %v260
      %v262 = vsel %vm238, %v209, 0.0
      %v263 = vadd.f32 %v261, %v262
      %v264 = vsel %vm238, %v213, 0.0
      %v265 = vadd.f32 %v263, %v264
      %v266 = vsel %vm238, %v217, 0.0
      %v267 = vadd.f32 %v265, %v266
      %v268 = vsel %vm238, %v221, 0.0
      %v269 = vadd.f32 %v267, %v268
      %270 = vadd.xlane.f32.xlu0 %v269
      %v271 = vpop.xlane.xlu0 %270
      %v272 = vrot.slane %v271, 4
      %v273 = vadd.f32 %v271, %v272
      %v274 = vrot.slane %v273, 2
      %v275 = vadd.f32 %v273, %v274
      %v276 = vrot.slane %v275, 1
      %v277 = vadd.f32 %v275, %v276
      %s278 = vtos %v277
      %s279 = sld [smem:[#allocation3]]
      %v280 = vlaneseq
      %v281 = vshrl.u32 %v280, 7
      %v282 = vlaneseq
      %v283 = vand.u32 %v282, 127
      %vm284 = vcmp.eq.s32.totalorder %v281, 0
      %vm285 = vcmp.eq.s32.totalorder %v283, 0
      %vm286 = vmand %vm284, %vm285
      %vm287 = vcmp.eq.s32.totalorder %v281, 1
      %vm288 = vmand %vm287, %vm285
      %v289 = vstv %s279
      %v290 = vsel %vm288, %v289, 0.0
      %v291 = vstv %s278
      %v292 = vsel %vm286, %v291, %v290
      %293 = vst [vmem:[#allocation9] sm:$0xff] %v292
    $region37: #{tpu_custom_call.1} parent=1 // pred_fallthru
      _
    // Predicated region
    $region38: #{tpu_custom_call.1} parent=1 // pred_check
      _
    $region39: #{tpu_custom_call.1} parent=1 // pred_check_branch
      %295 = sbr.rel (0) target = $region41
    $region40: #{tpu_custom_call.1} parent=1 // pred_region
      %s297 = ssub.s32 128, 128
      %298 = vsyncadd [#allocation6], %s297
      %s300 = sshll.u32 [#allocation9], 4
      %s301 = int_to_ptr.vmem [resolvable:$true] %s300
      %303 = dma.vmem_to_hbm [thread:$0]  %s301, 128, %s4, [#allocation6]
    $region41: #{tpu_custom_call.1} parent=1 // pred_fallthru
      _
    // Predicated region
    $region42: #{tpu_custom_call.1} parent=1 // pred_check
      _
    $region43: #{tpu_custom_call.1} parent=1 // pred_check_branch
      %305 = sbr.rel (0) target = $region45
    $region44: #{tpu_custom_call.1} parent=1 // pred_region
      _
    $region45: #{tpu_custom_call.1} parent=1 // pred_fallthru
      _
    // Predicated region
    $region46: #{tpu_custom_call.1} parent=1 // pred_check
      _
    $region47: #{tpu_custom_call.1} parent=1 // pred_check_branch
      %307 = sbr.rel (0) target = $region49
    $region48: #{tpu_custom_call.1} parent=1 // pred_region
      %308 = dma.done [#allocation6], 128
    $region49: #{tpu_custom_call.1} parent=1 // pred_fallthru
      _
    // Predicated region
    $region50: #{tpu_custom_call.1} parent=1 // pred_check
      _
    $region51: #{tpu_custom_call.1} parent=1 // pred_check_branch
      %310 = sbr.rel (0) target = $region53
    $region52: #{tpu_custom_call.1} parent=1 // pred_region
      _
    $region53: #{tpu_custom_call.1} parent=1 // pred_fallthru
      _
    %311 = vsyncpa [#allocation5], 1
    %312 = vsyncpa [#allocation8], 1
    %313 = vsyncpa [#allocation6], 1

</llo_original>
